<compile_context>
chip_gen: v7x
topology: tpu7x:2x2x1
jax: 0.10.0
libtpu: 0.0.40
codegen_flags: <defaults>
</compile_context>

<pallas_src>
import jax
import jax.numpy as jnp
from jax import lax
from jax.experimental import pallas as pl
from jax.experimental.pallas import tpu as pltpu

LEAKY_SLOPE = 0.1
BN_EPS = 1e-5


def _leaky_relu(x):
    return jnp.where(x > 0, x, LEAKY_SLOPE * x)


def _conv3x3_flat(x_flat, w_ref, wp, lo):
    """3x3 stride-1 conv on a channel-major, spatially-flattened, zero-padded
    slab.  x_flat: (Cin, (H+2)*(W+2)) bf16 value; w_ref: (Cout, 9*Cin) bf16 ref
    with columns ordered tap-major (kh*3+kw), input-channel minor.  Returns
    (Cout, Lo) f32 where Lo = H*(W+2) - 2; positions p = h*(W+2)+w, columns
    with w >= W are junk and are masked / cropped by the caller."""
    taps = [x_flat[:, kh * wp + kw: kh * wp + kw + lo]
            for kh in range(3) for kw in range(3)]
    patch = jnp.concatenate(taps, axis=0)                      # (9*Cin, Lo) bf16
    return jnp.dot(w_ref[...], patch, preferred_element_type=jnp.float32)


def basic_block_kernel(x_ref, w1_ref, s1_ref, b1_ref, w2_ref, s2_ref, b2_ref,
                       vm_ref, o_ref):
    # x_ref : (1, C, Lp)  bf16   flattened zero-padded input, Lp = (H+2)*(W+2)
    # w*_ref: (C, 9*C)    bf16   conv weights, columns tap-major
    # s*/b* : (C, 1)      f32    folded BN scale / bias (broadcast over lanes)
    # vm_ref: (1, Lo)     f32    1.0 at valid columns (w < W), 0.0 at junk cols
    # o_ref : (1, C, Lo)  bf16   flattened output (junk columns cropped on host)
    C, lo = o_ref.shape[1], o_ref.shape[2]
    lp = x_ref.shape[2]
    wp = (lp - lo - 2) // 2                 # = W + 2 (static)

    x = x_ref[0]                                               # (C, Lp) bf16

    # Residual = center-tap window of the padded input; kept bf16 until the
    # final add (widening to f32 there is exact).
    residual = x[:, wp + 1: wp + 1 + lo]

    # conv1 -> bn1 (folded) -> LeakyReLU(0.1); accumulation and BN math in f32.
    a1 = _conv3x3_flat(x, w1_ref, wp, lo)
    y1 = _leaky_relu(a1 * s1_ref[...] + b1_ref[...]) * vm_ref[...]

    # Re-embed conv1's activation into the zero-padded flat grid (value-level;
    # no scratch buffer, no extra VMEM round trip).  Junk/border columns are
    # already zeroed by vm_ref, so two lane concats complete the padding.
    zpad = jnp.zeros((C, wp + 1), jnp.bfloat16)
    y1p = jnp.concatenate([zpad, y1.astype(jnp.bfloat16), zpad], axis=1)  # (C, Lp)

    # conv2 -> bn2 -> + residual -> LeakyReLU(0.1)
    a2 = _conv3x3_flat(y1p, w2_ref, wp, lo)
    out = _leaky_relu(a2 * s2_ref[...] + b2_ref[...] + residual.astype(jnp.float32))
    o_ref[0] = out.astype(o_ref.dtype)


def basic_block_forward(x_nchw, params):
    """x_nchw: (N, C, H, W) float32. Returns (N, C, H, W) float32."""
    N, C, H, W = x_nchw.shape
    cout, cin = params["w1"].shape[:2]
    assert cin == C and cout == C, "downsample=None path requires inplanes == planes"
    wp = W + 2
    lp = (H + 2) * wp                 # flattened padded length
    lo = H * wp - 2                   # flattened output span (junk at w >= W)

    # Native NCHW: cast to bf16 BEFORE the pad (half-size pad write), zero-pad
    # spatially by 1, flatten (free reshape).  No NHWC transpose, no channel pad.
    xflat = jnp.pad(x_nchw.astype(jnp.bfloat16),
                    ((0, 0), (0, 0), (1, 1), (1, 1))).reshape(N, C, lp)

    # Conv weights OIHW -> (O, 9*I): columns ordered (kh, kw) tap-major,
    # input-channel minor, matching the tap stacking in _conv3x3_flat.
    def prep_w(w_oihw):
        return jnp.transpose(w_oihw, (0, 2, 3, 1)).reshape(C, 9 * C).astype(jnp.bfloat16)

    w1 = prep_w(params["w1"])
    w2 = prep_w(params["w2"])

    # Fold BN (eval mode) into per-channel scale/bias, broadcast over lanes.
    def fold_bn(g, b, m, v):
        s = g / jnp.sqrt(v + BN_EPS)
        return (s.reshape(C, 1).astype(jnp.float32),
                (b - m * s).reshape(C, 1).astype(jnp.float32))

    s1, b1 = fold_bn(params["bn1_g"], params["bn1_b"], params["bn1_m"], params["bn1_v"])
    s2, b2 = fold_bn(params["bn2_g"], params["bn2_b"], params["bn2_m"], params["bn2_v"])

    # Valid-column mask over the flattened output span: 1 where (p % (W+2)) < W.
    vmask = ((jnp.arange(lo, dtype=jnp.int32) % wp) < W).astype(jnp.float32).reshape(1, lo)

    out_flat = pl.pallas_call(
        basic_block_kernel,
        out_shape=jax.ShapeDtypeStruct((N, C, lo), jnp.bfloat16),
        grid_spec=pltpu.PrefetchScalarGridSpec(
            num_scalar_prefetch=0,
            grid=(N,),
            in_specs=[
                pl.BlockSpec((1, C, lp), lambda n: (n, 0, 0)),
                pl.BlockSpec((C, 9 * C), lambda n: (0, 0)),
                pl.BlockSpec((C, 1), lambda n: (0, 0)),
                pl.BlockSpec((C, 1), lambda n: (0, 0)),
                pl.BlockSpec((C, 9 * C), lambda n: (0, 0)),
                pl.BlockSpec((C, 1), lambda n: (0, 0)),
                pl.BlockSpec((C, 1), lambda n: (0, 0)),
                pl.BlockSpec((1, lo), lambda n: (0, 0)),
            ],
            out_specs=pl.BlockSpec((1, C, lo), lambda n: (n, 0, 0)),
        ),
        compiler_params=pltpu.CompilerParams(
            dimension_semantics=("parallel",),
            # Per-step footprint is only a few KiB of real data; 48 MiB stays
            # inside v7x's 64 MiB physical VMEM and is plenty for v5e/v6e.
            vmem_limit_bytes=48 * 1024 * 1024),
    )(xflat, w1, s1, b1, w2, s2, b2, vmask)

    # Un-flatten on the host: pad the 2 missing tail columns, reshape (free for
    # a contiguous array), crop the junk columns, and cast back to f32 only at
    # the module boundary (keep bf16 / flattened if the consumer allows it).
    out = jnp.pad(out_flat, ((0, 0), (0, 0), (0, 2))).reshape(N, C, H, wp)[..., :W]
    return out.astype(jnp.float32)


def _reference_forward(x_nchw, params):
    """Pure-JAX reference (lax.conv) mirroring the kernel's precision choices:
    bf16 conv inputs, f32 accumulation / BN / LeakyReLU / residual."""
    x = jnp.transpose(x_nchw, (0, 2, 3, 1)).astype(jnp.float32)
    xb = x.astype(jnp.bfloat16)
    dn = ("NHWC", "HWIO", "NHWC")

    def conv(inp_bf16, w_oihw):
        w = jnp.transpose(w_oihw, (2, 3, 1, 0)).astype(jnp.bfloat16)
        return lax.conv_general_dilated(inp_bf16, w, (1, 1), "SAME",
                                        dimension_numbers=dn,
                                        preferred_element_type=jnp.float32)

    def bn(inp, g, b, m, v):
        return (inp - m) / jnp.sqrt(v + BN_EPS) * g + b

    out = conv(xb, params["w1"])
    out = bn(out, params["bn1_g"], params["bn1_b"], params["bn1_m"], params["bn1_v"])
    out = _leaky_relu(out)
    out = conv(out.astype(jnp.bfloat16), params["w2"])
    out = bn(out, params["bn2_g"], params["bn2_b"], params["bn2_m"], params["bn2_v"])
    out = _leaky_relu(out + xb.astype(jnp.float32))
    return jnp.transpose(out, (0, 3, 1, 2))


def init_params(key, inplanes, planes):
    k1, k2, k3, k4 = jax.random.split(key, 4)
    return {
        "w1": 0.1 * jax.random.normal(k1, (planes, inplanes, 3, 3), jnp.float32),
        "w2": 0.1 * jax.random.normal(k2, (planes, planes, 3, 3), jnp.float32),
        # BatchNorm2d defaults (gamma=1, beta=0, mean=0, var=1), slightly
        # perturbed so the BN math is actually exercised.
        "bn1_g": 1.0 + 0.05 * jax.random.normal(k3, (planes,), jnp.float32),
        "bn1_b": 0.02 * jnp.arange(planes, dtype=jnp.float32),
        "bn1_m": 0.01 * jnp.arange(planes, dtype=jnp.float32),
        "bn1_v": jnp.ones((planes,), jnp.float32),
        "bn2_g": 1.0 + 0.05 * jax.random.normal(k4, (planes,), jnp.float32),
        "bn2_b": -0.02 * jnp.arange(planes, dtype=jnp.float32),
        "bn2_m": -0.01 * jnp.arange(planes, dtype=jnp.float32),
        "bn2_v": jnp.ones((planes,), jnp.float32),
    }


if __name__ == "__main__":
    key = jax.random.PRNGKey(0)
    kx, kp = jax.random.split(key)

    N, C, H, W = 2, 4, 16, 16           # inplanes = planes = 4, stride = 1
    x = jax.random.normal(kx, (N, C, H, W), jnp.float32)
    params = init_params(kp, C, C)

    out = jax.block_until_ready(basic_block_forward(x, params))
    ref = jax.block_until_ready(_reference_forward(x, params))

    assert out.shape == (N, C, H, W)
    max_err = float(jnp.max(jnp.abs(out - ref)))
    assert jnp.allclose(out, ref, atol=1e-2, rtol=1e-2), max_err

    print("KERNEL_OK")
</pallas_src>

<mosaic_0001>
module attributes {stable_mosaic.version = 11 : i64} {
  func.func @basic_block_kernel(%arg0: i32, %arg1: memref<1x4x324xbf16, #tpu.memory_space<vmem>>, %arg2: memref<4x36xbf16, #tpu.memory_space<vmem>>, %arg3: memref<4x1xf32, #tpu.memory_space<vmem>>, %arg4: memref<4x1xf32, #tpu.memory_space<vmem>>, %arg5: memref<4x36xbf16, #tpu.memory_space<vmem>>, %arg6: memref<4x1xf32, #tpu.memory_space<vmem>>, %arg7: memref<4x1xf32, #tpu.memory_space<vmem>>, %arg8: memref<1x286xf32, #tpu.memory_space<vmem>>, %arg9: memref<1x4x286xbf16, #tpu.memory_space<vmem>>) attributes {dimension_semantics = [#tpu.dimension_semantics<parallel>], iteration_bounds = array<i64: 2>, scalar_prefetch = 0 : i64, scratch_operands = 0 : i64, tpu.core_type = #tpu.core_type<tc>, window_params = [{transform_indices = @transform_0, window_bounds = array<i64: 1, 4, 324>}, {pipeline_mode = #tpu.pipeline_mode<synchronous>, transform_indices = @transform_1, window_bounds = array<i64: 4, 36>}, {pipeline_mode = #tpu.pipeline_mode<synchronous>, transform_indices = @transform_2, window_bounds = array<i64: 4, 1>}, {pipeline_mode = #tpu.pipeline_mode<synchronous>, transform_indices = @transform_3, window_bounds = array<i64: 4, 1>}, {pipeline_mode = #tpu.pipeline_mode<synchronous>, transform_indices = @transform_4, window_bounds = array<i64: 4, 36>}, {pipeline_mode = #tpu.pipeline_mode<synchronous>, transform_indices = @transform_5, window_bounds = array<i64: 4, 1>}, {pipeline_mode = #tpu.pipeline_mode<synchronous>, transform_indices = @transform_6, window_bounds = array<i64: 4, 1>}, {pipeline_mode = #tpu.pipeline_mode<synchronous>, transform_indices = @transform_7, window_bounds = array<i64: 1, 286>}, {transform_indices = @transform_8, window_bounds = array<i64: 1, 4, 286>}]} {
    %c0 = arith.constant 0 : index
    %c0_0 = arith.constant 0 : index
    %c0_1 = arith.constant 0 : index
    %0 = vector.load %arg1[%c0, %c0_0, %c0_1] : memref<1x4x324xbf16, #tpu.memory_space<vmem>>, vector<1x4x324xbf16>
    %1 = vector.shape_cast %0 : vector<1x4x324xbf16> to vector<4x324xbf16>
    %2 = vector.extract_strided_slice %1 {offsets = [0, 19], sizes = [4, 286], strides = [1, 1]} : vector<4x324xbf16> to vector<4x286xbf16>
    %3 = vector.extract_strided_slice %1 {offsets = [0, 0], sizes = [4, 286], strides = [1, 1]} : vector<4x324xbf16> to vector<4x286xbf16>
    %4 = vector.extract_strided_slice %1 {offsets = [0, 1], sizes = [4, 286], strides = [1, 1]} : vector<4x324xbf16> to vector<4x286xbf16>
    %5 = vector.extract_strided_slice %1 {offsets = [0, 2], sizes = [4, 286], strides = [1, 1]} : vector<4x324xbf16> to vector<4x286xbf16>
    %6 = vector.extract_strided_slice %1 {offsets = [0, 18], sizes = [4, 286], strides = [1, 1]} : vector<4x324xbf16> to vector<4x286xbf16>
    %7 = vector.extract_strided_slice %1 {offsets = [0, 19], sizes = [4, 286], strides = [1, 1]} : vector<4x324xbf16> to vector<4x286xbf16>
    %8 = vector.extract_strided_slice %1 {offsets = [0, 20], sizes = [4, 286], strides = [1, 1]} : vector<4x324xbf16> to vector<4x286xbf16>
    %9 = vector.extract_strided_slice %1 {offsets = [0, 36], sizes = [4, 286], strides = [1, 1]} : vector<4x324xbf16> to vector<4x286xbf16>
    %10 = vector.extract_strided_slice %1 {offsets = [0, 37], sizes = [4, 286], strides = [1, 1]} : vector<4x324xbf16> to vector<4x286xbf16>
    %11 = vector.extract_strided_slice %1 {offsets = [0, 38], sizes = [4, 286], strides = [1, 1]} : vector<4x324xbf16> to vector<4x286xbf16>
    %12 = tpu.concatenate %3, %4, %5, %6, %7, %8, %9, %10, %11 in 0 : vector<4x286xbf16>, vector<4x286xbf16>, vector<4x286xbf16>, vector<4x286xbf16>, vector<4x286xbf16>, vector<4x286xbf16>, vector<4x286xbf16>, vector<4x286xbf16>, vector<4x286xbf16> -> vector<36x286xbf16>
    %c0_2 = arith.constant 0 : index
    %c0_3 = arith.constant 0 : index
    %13 = vector.load %arg2[%c0_2, %c0_3] : memref<4x36xbf16, #tpu.memory_space<vmem>>, vector<4x36xbf16>
    %cst = arith.constant dense<0.000000e+00> : vector<4x286xf32>
    %14 = tpu.matmul %13, %12, %cst {dimension_numbers = #tpu.dot_dimension_numbers<[1], [0], [0], [1], [0, 0, 1, 1], [], []>} : vector<4x36xbf16>, vector<36x286xbf16>, vector<4x286xf32> -> vector<4x286xf32>
    %c0_4 = arith.constant 0 : index
    %c0_5 = arith.constant 0 : index
    %15 = vector.load %arg3[%c0_4, %c0_5] : memref<4x1xf32, #tpu.memory_space<vmem>>, vector<4x1xf32>
    %16 = vector.broadcast %15 : vector<4x1xf32> to vector<4x286xf32>
    %17 = arith.mulf %14, %16 : vector<4x286xf32>
    %c0_6 = arith.constant 0 : index
    %c0_7 = arith.constant 0 : index
    %18 = vector.load %arg4[%c0_6, %c0_7] : memref<4x1xf32, #tpu.memory_space<vmem>>, vector<4x1xf32>
    %19 = vector.broadcast %18 : vector<4x1xf32> to vector<4x286xf32>
    %20 = arith.addf %17, %19 : vector<4x286xf32>
    %cst_8 = arith.constant 0.000000e+00 : f32
    %21 = vector.broadcast %cst_8 : f32 to vector<4x286xf32>
    %22 = arith.cmpf ogt, %20, %21 : vector<4x286xf32>
    %cst_9 = arith.constant 1.000000e-01 : f32
    %23 = vector.broadcast %cst_9 : f32 to vector<4x286xf32>
    %24 = arith.mulf %23, %20 : vector<4x286xf32>
    %25 = arith.select %22, %20, %24 : vector<4x286xi1>, vector<4x286xf32>
    %c0_10 = arith.constant 0 : index
    %c0_11 = arith.constant 0 : index
    %26 = vector.load %arg8[%c0_10, %c0_11] : memref<1x286xf32, #tpu.memory_space<vmem>>, vector<1x286xf32>
    %27 = vector.broadcast %26 : vector<1x286xf32> to vector<4x286xf32>
    %28 = arith.mulf %25, %27 : vector<4x286xf32>
    %cst_12 = arith.constant 0.000000e+00 : bf16
    %29 = vector.broadcast %cst_12 : bf16 to vector<4x19xbf16>
    %30 = arith.truncf %28 : vector<4x286xf32> to vector<4x286xbf16>
    %31 = tpu.concatenate %29, %30, %29 in 1 : vector<4x19xbf16>, vector<4x286xbf16>, vector<4x19xbf16> -> vector<4x324xbf16>
    %32 = vector.extract_strided_slice %31 {offsets = [0, 0], sizes = [4, 286], strides = [1, 1]} : vector<4x324xbf16> to vector<4x286xbf16>
    %33 = vector.extract_strided_slice %31 {offsets = [0, 1], sizes = [4, 286], strides = [1, 1]} : vector<4x324xbf16> to vector<4x286xbf16>
    %34 = vector.extract_strided_slice %31 {offsets = [0, 2], sizes = [4, 286], strides = [1, 1]} : vector<4x324xbf16> to vector<4x286xbf16>
    %35 = vector.extract_strided_slice %31 {offsets = [0, 18], sizes = [4, 286], strides = [1, 1]} : vector<4x324xbf16> to vector<4x286xbf16>
    %36 = vector.extract_strided_slice %31 {offsets = [0, 19], sizes = [4, 286], strides = [1, 1]} : vector<4x324xbf16> to vector<4x286xbf16>
    %37 = vector.extract_strided_slice %31 {offsets = [0, 20], sizes = [4, 286], strides = [1, 1]} : vector<4x324xbf16> to vector<4x286xbf16>
    %38 = vector.extract_strided_slice %31 {offsets = [0, 36], sizes = [4, 286], strides = [1, 1]} : vector<4x324xbf16> to vector<4x286xbf16>
    %39 = vector.extract_strided_slice %31 {offsets = [0, 37], sizes = [4, 286], strides = [1, 1]} : vector<4x324xbf16> to vector<4x286xbf16>
    %40 = vector.extract_strided_slice %31 {offsets = [0, 38], sizes = [4, 286], strides = [1, 1]} : vector<4x324xbf16> to vector<4x286xbf16>
    %41 = tpu.concatenate %32, %33, %34, %35, %36, %37, %38, %39, %40 in 0 : vector<4x286xbf16>, vector<4x286xbf16>, vector<4x286xbf16>, vector<4x286xbf16>, vector<4x286xbf16>, vector<4x286xbf16>, vector<4x286xbf16>, vector<4x286xbf16>, vector<4x286xbf16> -> vector<36x286xbf16>
    %c0_13 = arith.constant 0 : index
    %c0_14 = arith.constant 0 : index
    %42 = vector.load %arg5[%c0_13, %c0_14] : memref<4x36xbf16, #tpu.memory_space<vmem>>, vector<4x36xbf16>
    %cst_15 = arith.constant dense<0.000000e+00> : vector<4x286xf32>
    %43 = tpu.matmul %42, %41, %cst_15 {dimension_numbers = #tpu.dot_dimension_numbers<[1], [0], [0], [1], [0, 0, 1, 1], [], []>} : vector<4x36xbf16>, vector<36x286xbf16>, vector<4x286xf32> -> vector<4x286xf32>
    %c0_16 = arith.constant 0 : index
    %c0_17 = arith.constant 0 : index
    %44 = vector.load %arg6[%c0_16, %c0_17] : memref<4x1xf32, #tpu.memory_space<vmem>>, vector<4x1xf32>
    %45 = vector.broadcast %44 : vector<4x1xf32> to vector<4x286xf32>
    %46 = arith.mulf %43, %45 : vector<4x286xf32>
    %c0_18 = arith.constant 0 : index
    %c0_19 = arith.constant 0 : index
    %47 = vector.load %arg7[%c0_18, %c0_19] : memref<4x1xf32, #tpu.memory_space<vmem>>, vector<4x1xf32>
    %48 = vector.broadcast %47 : vector<4x1xf32> to vector<4x286xf32>
    %49 = arith.addf %46, %48 : vector<4x286xf32>
    %50 = arith.extf %2 : vector<4x286xbf16> to vector<4x286xf32>
    %51 = arith.addf %49, %50 : vector<4x286xf32>
    %cst_20 = arith.constant 0.000000e+00 : f32
    %52 = vector.broadcast %cst_20 : f32 to vector<4x286xf32>
    %53 = arith.cmpf ogt, %51, %52 : vector<4x286xf32>
    %cst_21 = arith.constant 1.000000e-01 : f32
    %54 = vector.broadcast %cst_21 : f32 to vector<4x286xf32>
    %55 = arith.mulf %54, %51 : vector<4x286xf32>
    %56 = arith.select %53, %51, %55 : vector<4x286xi1>, vector<4x286xf32>
    %57 = arith.truncf %56 : vector<4x286xf32> to vector<4x286xbf16>
    %c0_22 = arith.constant 0 : index
    %c0_23 = arith.constant 0 : index
    %c0_24 = arith.constant 0 : index
    %58 = vector.load %arg9[%c0_22, %c0_23, %c0_24] : memref<1x4x286xbf16, #tpu.memory_space<vmem>>, vector<1x4x286xbf16>
    %59 = vector.shape_cast %58 : vector<1x4x286xbf16> to vector<4x286xbf16>
    %60 = vector.shape_cast %57 : vector<4x286xbf16> to vector<1x4x286xbf16>
    tpu.vector_store %arg9[%c0_22, %c0_23, %c0_24], %60 {strides = array<i32>} : memref<1x4x286xbf16, #tpu.memory_space<vmem>>, vector<1x4x286xbf16>,
    return
  }
  func.func @transform_0(%arg0: i32) -> (i32, i32, i32) {
    %c0_i32 = arith.constant 0 : i32
    %c0_i32_0 = arith.constant 0 : i32
    %c0_i32_1 = arith.constant 0 : i32
    return %arg0, %c0_i32, %c0_i32_0 : i32, i32, i32
  }
  func.func @transform_1(%arg0: i32) -> (i32, i32) {
    %c0_i32 = arith.constant 0 : i32
    %c0_i32_0 = arith.constant 0 : i32
    %c0_i32_1 = arith.constant 0 : i32
    return %c0_i32, %c0_i32_0 : i32, i32
  }
  func.func @transform_2(%arg0: i32) -> (i32, i32) {
    %c0_i32 = arith.constant 0 : i32
    %c0_i32_0 = arith.constant 0 : i32
    %c0_i32_1 = arith.constant 0 : i32
    return %c0_i32, %c0_i32_0 : i32, i32
  }
  func.func @transform_3(%arg0: i32) -> (i32, i32) {
    %c0_i32 = arith.constant 0 : i32
    %c0_i32_0 = arith.constant 0 : i32
    %c0_i32_1 = arith.constant 0 : i32
    return %c0_i32, %c0_i32_0 : i32, i32
  }
  func.func @transform_4(%arg0: i32) -> (i32, i32) {
    %c0_i32 = arith.constant 0 : i32
    %c0_i32_0 = arith.constant 0 : i32
    %c0_i32_1 = arith.constant 0 : i32
    return %c0_i32, %c0_i32_0 : i32, i32
  }
  func.func @transform_5(%arg0: i32) -> (i32, i32) {
    %c0_i32 = arith.constant 0 : i32
    %c0_i32_0 = arith.constant 0 : i32
    %c0_i32_1 = arith.constant 0 : i32
    return %c0_i32, %c0_i32_0 : i32, i32
  }
  func.func @transform_6(%arg0: i32) -> (i32, i32) {
    %c0_i32 = arith.constant 0 : i32
    %c0_i32_0 = arith.constant 0 : i32
    %c0_i32_1 = arith.constant 0 : i32
    return %c0_i32, %c0_i32_0 : i32, i32
  }
  func.func @transform_7(%arg0: i32) -> (i32, i32) {
    %c0_i32 = arith.constant 0 : i32
    %c0_i32_0 = arith.constant 0 : i32
    %c0_i32_1 = arith.constant 0 : i32
    return %c0_i32, %c0_i32_0 : i32, i32
  }
  func.func @transform_8(%arg0: i32) -> (i32, i32, i32) {
    %c0_i32 = arith.constant 0 : i32
    %c0_i32_0 = arith.constant 0 : i32
    %c0_i32_1 = arith.constant 0 : i32
    return %arg0, %c0_i32, %c0_i32_0 : i32, i32, i32
  }
}

</mosaic_0001>

<llo_original>
// kernel: tpu_custom_call.1
$region0: #{tpu_custom_call.1}
  #allocation0 [shape = 'u32[]', space=smem, size = 0x4, offset = 0x4, fixed_abs, tag = 'smem constant byte address 0x4 - core index']
  #allocation1 [shape = 'u32[144,128]{1,0:T(1,128)}', space=vmem, size = 0x12000, scoped, tag = 'internal scratch']
  %s0 = inlined_call_operand.vmem [shape: bf16[2,4,324], index: 0, kind: input, shape index: {}]
  %s1 = inlined_call_operand.vmem [shape: bf16[4,36], index: 1, kind: input, shape index: {}]
  %s2 = inlined_call_operand.vmem [shape: f32[4,1], index: 2, kind: input, shape index: {}]
  %s3 = inlined_call_operand.vmem [shape: f32[4,1], index: 3, kind: input, shape index: {}]
  %s4 = inlined_call_operand.vmem [shape: bf16[4,36], index: 4, kind: input, shape index: {}]
  %s5 = inlined_call_operand.vmem [shape: f32[4,1], index: 5, kind: input, shape index: {}]
  %s6 = inlined_call_operand.vmem [shape: f32[4,1], index: 6, kind: input, shape index: {}]
  %s7 = inlined_call_operand.vmem [shape: f32[1,286], index: 7, kind: input, shape index: {}]
  %s8 = inlined_call_operand.hbm [shape: bf16[2,4,286], index: 8, kind: output, shape index: {}]
  %s9 = sld [smem:[#allocation0]]
  $region65: #{tpu_custom_call.1} parent=0
    _
  %s11 = ssub.s32 1, %s9
  %s12 = scalar_select 0, %s11, %s9
  $region1: #{tpu_custom_call.1} parent=0
    #allocation2 [shape = 'u8[6144]{0}', space=vmem, size = 0x1800, scoped, tag = 'output window, operand 0']
    #allocation3 [shape = 's32[2]{0}', space=sflag, size = 0x8, scoped, tag = 'scoped memory for tpu_custom_call.1']
    %13 = vsyncpa [#allocation3], 0
    %s14 = scalar_lea.sflag [#allocation3], 1
    %15 = vsyncpa %s14, 0
    loop: start=0, step=1, limit=4
    $region2: #{tpu_custom_call.1} parent=1 // loop_pre_header
      _
    $region3: #{tpu_custom_call.1} parent=1 // loop_header
      %s17 = sphi 0, %s21
      %p18 = scmp.ge.s32.totalorder %s17, 4
      %s27 = sphi 0, %s29
      %s30 = sphi 0, %s27
      %s31 = sphi 0, %s30
      %s47 = sphi 0, %s31
      %s51 = sphi 0, %s51
      %s53 = sphi 0, %s51
      %s54 = sphi 0, %s53
      %s68 = sphi 0, %s54
      %s72 = sphi 0, %s72
      %s74 = sphi 0, %s72
      %s75 = sphi 0, %s74
      %s89 = sphi 0, %s75
      %s93 = sphi 0, %s93
      %s95 = sphi 0, %s93
      %s96 = sphi 0, %s95
      %s110 = sphi 0, %s96
      %s114 = sphi 0, %s114
      %s116 = sphi 0, %s114
      %s117 = sphi 0, %s116
      %s131 = sphi 0, %s117
      %s135 = sphi 0, %s135
      %s137 = sphi 0, %s135
      %s138 = sphi 0, %s137
      %s152 = sphi 0, %s138
      %s156 = sphi 0, %s156
      %s158 = sphi 0, %s156
      %s159 = sphi 0, %s158
      %s173 = sphi 0, %s159
      %s177 = sphi 0, %s177
      %s179 = sphi 0, %s177
      %s180 = sphi 0, %s179
      %s194 = sphi 0, %s180
      %s200 = sphi 0, %s202
      %s203 = sphi 0, %s200
      %s204 = sphi 0, %s203
      %s220 = sphi 0, %s204
    $region4: #{tpu_custom_call.1} parent=1 // loop_header_branch
      %20 = sbr.rel (%p18) target = $region8
    $region5: #{tpu_custom_call.1} parent=1 // loop_body
      %s22 = ssub.s32 %s17, 1
      %s23 = ssub.s32 %s17, 2
      %s24 = sadd.s32 %s17, 1
      %s25 = ssub.s32 %s17, %s24
      %p26 = scmp.eq.s32.totalorder %s25, 0
      %s28 = sadd.s32 %s27, 1
      %s29 = scalar_select %p26, %s27, %s28
      %p32 = pneg %p26
      %p33 = scmp.eq.s32.totalorder %s17, 1
      %p34 = por %p32, %p33
      %p35 = scmp.ne.s32.totalorder %s27, %s30
      %p36 = scmp.eq.s32.totalorder %s17, 0
      %p37 = por %p35, %p36
      %p38 = scmp.ne.s32.totalorder %s27, %s30
      %p39 = scmp.eq.s32.totalorder %s22, 1
      %p40 = por %p38, %p39
      %p41 = scmp.ne.s32.totalorder %s30, %s31
      %p42 = scmp.eq.s32.totalorder %s22, 0
      %p43 = por %p41, %p42
      %p44 = scmp.ne.s32.totalorder %s30, %s31
      %p45 = scmp.eq.s32.totalorder %s23, 1
      %p46 = por %p44, %p45
      %p48 = scmp.ne.s32.totalorder %s31, %s47
      %p49 = scmp.eq.s32.totalorder %s23, 0
      %p50 = por %p48, %p49
      %s52 = sadd.s32 %s51, 1
      %p55 = scmp.eq.s32.totalorder %s17, 1
      %p56 = scmp.ne.s32.totalorder %s51, %s53
      %p57 = scmp.eq.s32.totalorder %s17, 0
      %p58 = por %p56, %p57
      %p59 = scmp.ne.s32.totalorder %s51, %s53
      %p60 = scmp.eq.s32.totalorder %s22, 1
      %p61 = por %p59, %p60
      %p62 = scmp.ne.s32.totalorder %s53, %s54
      %p63 = scmp.eq.s32.totalorder %s22, 0
      %p64 = por %p62, %p63
      %p65 = scmp.ne.s32.totalorder %s53, %s54
      %p66 = scmp.eq.s32.totalorder %s23, 1
      %p67 = por %p65, %p66
      %p69 = scmp.ne.s32.totalorder %s54, %s68
      %p70 = scmp.eq.s32.totalorder %s23, 0
      %p71 = por %p69, %p70
      %s73 = sadd.s32 %s72, 1
      %p76 = scmp.eq.s32.totalorder %s17, 1
      %p77 = scmp.ne.s32.totalorder %s72, %s74
      %p78 = scmp.eq.s32.totalorder %s17, 0
      %p79 = por %p77, %p78
      %p80 = scmp.ne.s32.totalorder %s72, %s74
      %p81 = scmp.eq.s32.totalorder %s22, 1
      %p82 = por %p80, %p81
      %p83 = scmp.ne.s32.totalorder %s74, %s75
      %p84 = scmp.eq.s32.totalorder %s22, 0
      %p85 = por %p83, %p84
      %p86 = scmp.ne.s32.totalorder %s74, %s75
      %p87 = scmp.eq.s32.totalorder %s23, 1
      %p88 = por %p86, %p87
      %p90 = scmp.ne.s32.totalorder %s75, %s89
      %p91 = scmp.eq.s32.totalorder %s23, 0
      %p92 = por %p90, %p91
      %s94 = sadd.s32 %s93, 1
      %p97 = scmp.eq.s32.totalorder %s17, 1
      %p98 = scmp.ne.s32.totalorder %s93, %s95
      %p99 = scmp.eq.s32.totalorder %s17, 0
      %p100 = por %p98, %p99
      %p101 = scmp.ne.s32.totalorder %s93, %s95
      %p102 = scmp.eq.s32.totalorder %s22, 1
      %p103 = por %p101, %p102
      %p104 = scmp.ne.s32.totalorder %s95, %s96
      %p105 = scmp.eq.s32.totalorder %s22, 0
      %p106 = por %p104, %p105
      %p107 = scmp.ne.s32.totalorder %s95, %s96
      %p108 = scmp.eq.s32.totalorder %s23, 1
      %p109 = por %p107, %p108
      %p111 = scmp.ne.s32.totalorder %s96, %s110
      %p112 = scmp.eq.s32.totalorder %s23, 0
      %p113 = por %p111, %p112
      %s115 = sadd.s32 %s114, 1
      %p118 = scmp.eq.s32.totalorder %s17, 1
      %p119 = scmp.ne.s32.totalorder %s114, %s116
      %p120 = scmp.eq.s32.totalorder %s17, 0
      %p121 = por %p119, %p120
      %p122 = scmp.ne.s32.totalorder %s114, %s116
      %p123 = scmp.eq.s32.totalorder %s22, 1
      %p124 = por %p122, %p123
      %p125 = scmp.ne.s32.totalorder %s116, %s117
      %p126 = scmp.eq.s32.totalorder %s22, 0
      %p127 = por %p125, %p126
      %p128 = scmp.ne.s32.totalorder %s116, %s117
      %p129 = scmp.eq.s32.totalorder %s23, 1
      %p130 = por %p128, %p129
      %p132 = scmp.ne.s32.totalorder %s117, %s131
      %p133 = scmp.eq.s32.totalorder %s23, 0
      %p134 = por %p132, %p133
      %s136 = sadd.s32 %s135, 1
      %p139 = scmp.eq.s32.totalorder %s17, 1
      %p140 = scmp.ne.s32.totalorder %s135, %s137
      %p141 = scmp.eq.s32.totalorder %s17, 0
      %p142 = por %p140, %p141
      %p143 = scmp.ne.s32.totalorder %s135, %s137
      %p144 = scmp.eq.s32.totalorder %s22, 1
      %p145 = por %p143, %p144
      %p146 = scmp.ne.s32.totalorder %s137, %s138
      %p147 = scmp.eq.s32.totalorder %s22, 0
      %p148 = por %p146, %p147
      %p149 = scmp.ne.s32.totalorder %s137, %s138
      %p150 = scmp.eq.s32.totalorder %s23, 1
      %p151 = por %p149, %p150
      %p153 = scmp.ne.s32.totalorder %s138, %s152
      %p154 = scmp.eq.s32.totalorder %s23, 0
      %p155 = por %p153, %p154
      %s157 = sadd.s32 %s156, 1
      %p160 = scmp.eq.s32.totalorder %s17, 1
      %p161 = scmp.ne.s32.totalorder %s156, %s158
      %p162 = scmp.eq.s32.totalorder %s17, 0
      %p163 = por %p161, %p162
      %p164 = scmp.ne.s32.totalorder %s156, %s158
      %p165 = scmp.eq.s32.totalorder %s22, 1
      %p166 = por %p164, %p165
      %p167 = scmp.ne.s32.totalorder %s158, %s159
      %p168 = scmp.eq.s32.totalorder %s22, 0
      %p169 = por %p167, %p168
      %p170 = scmp.ne.s32.totalorder %s158, %s159
      %p171 = scmp.eq.s32.totalorder %s23, 1
      %p172 = por %p170, %p171
      %p174 = scmp.ne.s32.totalorder %s159, %s173
      %p175 = scmp.eq.s32.totalorder %s23, 0
      %p176 = por %p174, %p175
      %s178 = sadd.s32 %s177, 1
      %p181 = scmp.eq.s32.totalorder %s17, 1
      %p182 = scmp.ne.s32.totalorder %s177, %s179
      %p183 = scmp.eq.s32.totalorder %s17, 0
      %p184 = por %p182, %p183
      %p185 = scmp.ne.s32.totalorder %s177, %s179
      %p186 = scmp.eq.s32.totalorder %s22, 1
      %p187 = por %p185, %p186
      %p188 = scmp.ne.s32.totalorder %s179, %s180
      %p189 = scmp.eq.s32.totalorder %s22, 0
      %p190 = por %p188, %p189
      %p191 = scmp.ne.s32.totalorder %s179, %s180
      %p192 = scmp.eq.s32.totalorder %s23, 1
      %p193 = por %p191, %p192
      %p195 = scmp.ne.s32.totalorder %s180, %s194
      %p196 = scmp.eq.s32.totalorder %s23, 0
      %p197 = por %p195, %p196
      %s198 = ssub.s32 %s17, %s24
      %p199 = scmp.eq.s32.totalorder %s198, 0
      %s201 = sadd.s32 %s200, 1
      %s202 = scalar_select %p199, %s200, %s201
      %p205 = pneg %p199
      %p206 = scmp.eq.s32.totalorder %s17, 1
      %p207 = por %p205, %p206
      %p208 = scmp.ne.s32.totalorder %s200, %s203
      %p209 = scmp.eq.s32.totalorder %s17, 0
      %p210 = por %p208, %p209
      %p211 = scmp.ne.s32.totalorder %s200, %s203
      %p212 = scmp.eq.s32.totalorder %s22, 1
      %p213 = por %p211, %p212
      %p214 = scmp.ne.s32.totalorder %s203, %s204
      %p215 = scmp.eq.s32.totalorder %s22, 0
      %p216 = por %p214, %p215
      %p217 = scmp.ne.s32.totalorder %s203, %s204
      %p218 = scmp.eq.s32.totalorder %s23, 1
      %p219 = por %p217, %p218
      %p221 = scmp.ne.s32.totalorder %s204, %s220
      %p222 = scmp.eq.s32.totalorder %s23, 0
      %p223 = por %p221, %p222
      %p224 = scmp.le.s32.totalorder 1, %s17
      %p225 = scmp.lt.s32.totalorder %s17, 3
      %p226 = pnand %p224, %p225
      %p227 = pneg %p226
      // Predicated region
      $region9: #{tpu_custom_call.1} parent=5 // pred_check
        _
      $region10: #{tpu_custom_call.1} parent=5 // pred_check_branch
        %229 = sbr.rel (%p226) target = $region12
      $region11: #{tpu_custom_call.1} parent=5 // pred_region
        %s230 = ssub.s32 %s17, 1
        // Predicated region
        $region13: #{tpu_custom_call.1} parent=11 // pred_check
          %p231 = pneg %p64
        $region14: #{tpu_custom_call.1} parent=11 // pred_check_branch
          %233 = sbr.rel (%p231) target = $region16
        $region15: #{tpu_custom_call.1} parent=11 // pred_region
          _
        $region16: #{tpu_custom_call.1} parent=11 // pred_fallthru
          _
        // Predicated region
        $region17: #{tpu_custom_call.1} parent=11 // pred_check
          %p234 = pneg %p85
        $region18: #{tpu_custom_call.1} parent=11 // pred_check_branch
          %236 = sbr.rel (%p234) target = $region20
        $region19: #{tpu_custom_call.1} parent=11 // pred_region
          _
        $region20: #{tpu_custom_call.1} parent=11 // pred_fallthru
          _
        // Predicated region
        $region21: #{tpu_custom_call.1} parent=11 // pred_check
          %p237 = pneg %p106
        $region22: #{tpu_custom_call.1} parent=11 // pred_check_branch
          %239 = sbr.rel (%p237) target = $region24
        $region23: #{tpu_custom_call.1} parent=11 // pred_region
          _
        $region24: #{tpu_custom_call.1} parent=11 // pred_fallthru
          _
        // Predicated region
        $region25: #{tpu_custom_call.1} parent=11 // pred_check
          %p240 = pneg %p127
        $region26: #{tpu_custom_call.1} parent=11 // pred_check_branch
          %242 = sbr.rel (%p240) target = $region28
        $region27: #{tpu_custom_call.1} parent=11 // pred_region
          _
        $region28: #{tpu_custom_call.1} parent=11 // pred_fallthru
          _
        // Predicated region
        $region29: #{tpu_custom_call.1} parent=11 // pred_check
          %p243 = pneg %p148
        $region30: #{tpu_custom_call.1} parent=11 // pred_check_branch
          %245 = sbr.rel (%p243) target = $region32
        $region31: #{tpu_custom_call.1} parent=11 // pred_region
          _
        $region32: #{tpu_custom_call.1} parent=11 // pred_fallthru
          _
        // Predicated region
        $region33: #{tpu_custom_call.1} parent=11 // pred_check
          %p246 = pneg %p169
        $region34: #{tpu_custom_call.1} parent=11 // pred_check_branch
          %248 = sbr.rel (%p246) target = $region36
        $region35: #{tpu_custom_call.1} parent=11 // pred_region
          _
        $region36: #{tpu_custom_call.1} parent=11 // pred_fallthru
          _
        // Predicated region
        $region37: #{tpu_custom_call.1} parent=11 // pred_check
          %p249 = pneg %p190
        $region38: #{tpu_custom_call.1} parent=11 // pred_check_branch
          %251 = sbr.rel (%p249) target = $region40
        $region39: #{tpu_custom_call.1} parent=11 // pred_region
          _
        $region40: #{tpu_custom_call.1} parent=11 // pred_fallthru
          _
      $region12: #{tpu_custom_call.1} parent=5 // pred_fallthru
        _
      %p252 = scmp.lt.s32.totalorder %s17, 2
      // Predicated region
      $region41: #{tpu_custom_call.1} parent=5 // pred_check
        %p253 = pneg %p252
      $region42: #{tpu_custom_call.1} parent=5 // pred_check_branch
        %255 = sbr.rel (%p253) target = $region44
      $region43: #{tpu_custom_call.1} parent=5 // pred_region
        // Predicated region
        $region45: #{tpu_custom_call.1} parent=43 // pred_check
          %p256 = pneg %p37
        $region46: #{tpu_custom_call.1} parent=43 // pred_check_branch
          %258 = sbr.rel (%p256) target = $region48
        $region47: #{tpu_custom_call.1} parent=43 // pred_region
          %p259 = scmp.lt.s32.totalorder %s17, 1
          %s260 = scalar_select %p259, %s17, 1
          %s261 = smul.addr %s260, 3
          %s262 = smul.addr %s261, 2
          %s263 = scalar_lea.vmem %s0, %s262
        $region48: #{tpu_custom_call.1} parent=43 // pred_fallthru
          _
      $region44: #{tpu_custom_call.1} parent=5 // pred_fallthru
        _
      %p264 = scmp.le.s32.totalorder 1, %s17
      %p265 = scmp.lt.s32.totalorder %s17, 3
      %p266 = pnand %p264, %p265
      %p267 = pneg %p266
      // Predicated region
      $region49: #{tpu_custom_call.1} parent=5 // pred_check
        _
      $region50: #{tpu_custom_call.1} parent=5 // pred_check_branch
        %269 = sbr.rel (%p266) target = $region52
      $region51: #{tpu_custom_call.1} parent=5 // pred_region
        %s270 = ssub.s32 %s17, 1
        %p271 = scmp.lt.s32.totalorder %s22, 1
        %s272 = scalar_select %p271, %s22, 1
        %s273 = smul.addr %s272, 3
        %s274 = smul.addr %s273, 2
        %s275 = scalar_lea.vmem %s0, %s274
        %p276 = pneg %p43
        %p277 = pneg %p40
        %p278 = pneg %p64
        %p279 = pneg %p61
        %p280 = pneg %p85
        %p281 = pneg %p82
        %p282 = pneg %p106
        %p283 = pneg %p103
        %p284 = pneg %p127
        %p285 = pneg %p124
        %p286 = pneg %p148
        %p287 = pneg %p145
        %p288 = pneg %p169
        %p289 = pneg %p166
        %p290 = pneg %p190
        %p291 = pneg %p187
        %p292 = pneg %p216
        %p293 = pneg %p213
        %s294 = sand.u32 %s203, 1
        %s295 = scalar_lea.sflag [#allocation3], %s294
        %s296 = sand.u32 %s203, 1
        %s297 = smul.addr %s296, 6
        %s298 = scalar_lea.vmem [#allocation2], %s297
        %p299 = scmp.lt.s32.totalorder %s22, 1
        %s300 = scalar_select %p299, %s22, 1
        %s301 = smul.addr %s300, 3
        %s302 = smul.addr %s301, 2
        %s303 = scalar_lea.vmem %s0, %s302
        %v305 = vld [vmem:[%s303] sm:$0x3f]
        %v307 = vcombine.high %v305, %v305
        %v309 = vunpack.c.l.s4 1983009808
        %v310 = vunpack.c.0.s8 %v309
        %v311 = vlaneseq
        %v312 = vshrl.u32 %v311, 7
        %v313 = vsub.s32 %v310, %v312
        %v314 = vrot.slane %v305, %v313
        %v316 = vunpack.c.l.s4 1983009808
        %v317 = vunpack.c.0.s8 %v316
        %v318 = vlaneseq
        %v319 = vshrl.u32 %v318, 7
        %v320 = vsub.s32 %v317, %v319
        %v321 = vrot.slane %v307, %v320
        %v322 = vcombine.high %v314, %v314
        %v323 = vcombine.low %v305, %v305
        %v325 = vunpack.c.l.s4 1983009808
        %v326 = vunpack.c.0.s8 %v325
        %v327 = vlaneseq
        %v328 = vshrl.u32 %v327, 7
        %v329 = vsub.s32 %v326, %v328
        %v330 = vrot.slane %v323, %v329
        %v331 = vcombine.high %v330, %v330
        %332 = vrot.lane.b32.xlu0 %v330, 127
        %v333 = vpop.permute.xlu0 %332
        %334 = vrot.lane.b32.xlu0 %v331, 127
        %v335 = vpop.permute.xlu0 %334
        %336 = vrot.lane.b32.xlu0 %v314, 127
        %v337 = vpop.permute.xlu0 %336
        %vm338 = vcmask 1039360
        %v339 = vsel %vm338, %v333, %v335
        %v340 = vsel %vm338, %v335, %v337
        %v341 = vcombine.low %v314, %v314
        %v342 = vcombine.low %v321, %v321
        %343 = vrot.lane.b32.xlu0 %v341, 126
        %v344 = vpop.permute.xlu0 %343
        %345 = vrot.lane.b32.xlu0 %v314, 126
        %v346 = vpop.permute.xlu0 %345
        %347 = vrot.lane.b32.xlu0 %v342, 126
        %v348 = vpop.permute.xlu0 %347
        %vm349 = vcmask 1031168
        %v350 = vsel %vm349, %v344, %v346
        %v351 = vsel %vm349, %v346, %v348
        %v352 = vcombine.low %v330, %v330
        %353 = vrot.lane.b32.xlu0 %v352, 110
        %v354 = vpop.permute.xlu0 %353
        %355 = vrot.lane.b32.xlu0 %v330, 110
        %v356 = vpop.permute.xlu0 %355
        %357 = vrot.lane.b32.xlu0 %v341, 110
        %v358 = vpop.permute.xlu0 %357
        %vm359 = vcmask 900096
        %v360 = vsel %vm359, %v354, %v356
        %v361 = vsel %vm359, %v356, %v358
        %362 = vrot.lane.b32.xlu0 %v314, 109
        %v363 = vpop.permute.xlu0 %362
        %364 = vrot.lane.b32.xlu0 %v322, 109
        %v365 = vpop.permute.xlu0 %364
        %366 = vrot.lane.b32.xlu0 %v321, 109
        %v367 = vpop.permute.xlu0 %366
        %vm368 = vcmask 891904
        %v369 = vsel %vm368, %v363, %v365
        %v370 = vsel %vm368, %v365, %v367
        %371 = vrot.lane.b32.xlu0 %v330, 108
        %v372 = vpop.permute.xlu0 %371
        %373 = vrot.lane.b32.xlu0 %v331, 108
        %v374 = vpop.permute.xlu0 %373
        %375 = vrot.lane.b32.xlu0 %v314, 108
        %v376 = vpop.permute.xlu0 %375
        %vm377 = vcmask 883712
        %v378 = vsel %vm377, %v372, %v374
        %v379 = vsel %vm377, %v374, %v376
        %380 = vrot.lane.b32.xlu0 %v341, 92
        %v381 = vpop.permute.xlu0 %380
        %382 = vrot.lane.b32.xlu0 %v314, 92
        %v383 = vpop.permute.xlu0 %382
        %384 = vrot.lane.b32.xlu0 %v342, 92
        %v385 = vpop.permute.xlu0 %384
        %vm386 = vcmask 752640
        %v387 = vsel %vm386, %v381, %v383
        %v388 = vsel %vm386, %v383, %v385
        %389 = vrot.lane.b32.xlu0 %v352, 91
        %v390 = vpop.permute.xlu0 %389
        %391 = vrot.lane.b32.xlu0 %v330, 91
        %v392 = vpop.permute.xlu0 %391
        %393 = vrot.lane.b32.xlu0 %v341, 91
        %v394 = vpop.permute.xlu0 %393
        %vm395 = vcmask 744448
        %v396 = vsel %vm395, %v390, %v392
        %v397 = vsel %vm395, %v392, %v394
        %398 = vrot.lane.b32.xlu0 %v314, 90
        %v399 = vpop.permute.xlu0 %398
        %400 = vrot.lane.b32.xlu0 %v322, 90
        %v401 = vpop.permute.xlu0 %400
        %402 = vrot.lane.b32.xlu0 %v321, 90
        %v403 = vpop.permute.xlu0 %402
        %vm404 = vcmask 736256
        %v405 = vsel %vm404, %v399, %v401
        %v406 = vsel %vm404, %v401, %v403
        %vm407 = vcmask 1041408
        %v410 = vsel %vm407, %v314, %v339
        %v413 = vsel %vm407, %v322, %v340
        %v416 = vsel %vm407, %v321, %v337
        %vm417 = vcmask 1043456
        %v419 = vsel %vm417, %v410, %v350
        %v421 = vsel %vm417, %v413, %v351
        %v423 = vsel %vm417, %v416, %v348
        %vm424 = vcmask 1045504
        %v426 = vsel %vm424, %v419, %v360
        %v429 = vsel %vm424, %v421, %v361
        %v432 = vsel %vm424, %v423, %v358
        %v436 = vsel %vm407, %v369, %v378
        %v439 = vsel %vm407, %v370, %v379
        %v442 = vsel %vm407, %v367, %v376
        %v444 = vsel %vm417, %v436, %v387
        %v446 = vsel %vm417, %v439, %v388
        %v448 = vsel %vm417, %v442, %v385
        %v450 = vsel %vm424, %v444, %v396
        %v453 = vsel %vm424, %v446, %v397
        %v456 = vsel %vm424, %v448, %v394
        %v458 = vld [vmem:[%s1] sm:$0x3]
        %vm459 = vcmask 293888
        %v461 = vsel %vm459, %v458, 0
        %v464 = vsel %vm407, %v405, 0
        %v467 = vsel %vm407, %v406, 0
        %v470 = vsel %vm407, %v403, 0
        %472 = vmatprep.subr.bf16.mxu0 %v429
        %473 = vmatpush1.bf16.msra.mxu0 %v426
        %474 = vmatprep.subr.bf16.mxu0 %v453
        %475 = vmatpush1.bf16.msra.mxu0 %v450
        %476 = vmatprep.subr.bf16.mxu0 %v467
        %477 = vmatpush1.bf16.msra.mxu0 %v464
        %478 = vmatprep.subr.bf16.mxu0 0
        %479 = vmatpush1.bf16.msra.mxu0 0
        %480 = vmatprep.subr.bf16.mxu0 0
        %481 = vmatpush1.bf16.msra.mxu0 0
        %482 = vmatprep.subr.bf16.mxu0 0
        %483 = vmatpush1.bf16.msra.mxu0 0
        %484 = vmatprep.subr.bf16.mxu0 0
        %485 = vmatpush1.bf16.msra.mxu0 0
        %486 = vmatprep.subr.bf16.mxu0 0
        %487 = vmatpush1.bf16.msra.mxu0 0
        %488 = vmatprep.subr.bf16.mxu0 0
        %489 = vmatpush1.bf16.msra.mxu0 0
        %490 = vmatprep.subr.bf16.mxu0 0
        %491 = vmatpush1.bf16.msra.mxu0 0
        %492 = vmatprep.subr.bf16.mxu0 0
        %493 = vmatpush1.bf16.msra.mxu0 0
        %494 = vmatprep.subr.bf16.mxu0 0
        %495 = vmatpush1.bf16.msra.mxu0 0
        %496 = vmatprep.subr.bf16.mxu0 0
        %497 = vmatpush1.bf16.msra.mxu0 0
        %498 = vmatprep.subr.bf16.mxu0 0
        %499 = vmatpush1.bf16.msra.mxu0 0
        %500 = vmatprep.subr.bf16.mxu0 0
        %501 = vmatpush1.bf16.msra.mxu0 0
        %502 = vmatprep.subr.bf16.mxu0 0
        %503 = vmatpush1.bf16.msra.mxu0 0
        %504 = vmatprep.mubr.bf16.mxu0 0
        %505 = vmatmul.mubr.bf16.gmra.mrb[0].mxu0 %v461
        %v506 = vpop.f32.mrb[0].mxu0
        %v507 = vadd.f32 0.0, %v506
        %v508 = vpop.f32.mrb[0].mxu0
        %v509 = vadd.f32 0.0, %v508
        %v510 = vpop.f32.mrb[0].mxu0
        %v511 = vpop.f32.mrb[0].mxu0
        %512 = vdwg.mxu0
        %513 = vmatprep.subr.bf16.mxu0 0
        %514 = vmatpush1.bf16.msra.mxu0 %v432
        %515 = vmatprep.subr.bf16.mxu0 0
        %516 = vmatpush1.bf16.msra.mxu0 %v456
        %517 = vmatprep.subr.bf16.mxu0 0
        %518 = vmatpush1.bf16.msra.mxu0 %v470
        %519 = vmatprep.subr.bf16.mxu0 0
        %520 = vmatpush1.bf16.msra.mxu0 0
        %521 = vmatprep.subr.bf16.mxu0 0
        %522 = vmatpush1.bf16.msra.mxu0 0
        %523 = vmatprep.subr.bf16.mxu0 0
        %524 = vmatpush1.bf16.msra.mxu0 0
        %525 = vmatprep.subr.bf16.mxu0 0
        %526 = vmatpush1.bf16.msra.mxu0 0
        %527 = vmatprep.subr.bf16.mxu0 0
        %528 = vmatpush1.bf16.msra.mxu0 0
        %529 = vmatprep.subr.bf16.mxu0 0
        %530 = vmatpush1.bf16.msra.mxu0 0
        %531 = vmatprep.subr.bf16.mxu0 0
        %532 = vmatpush1.bf16.msra.mxu0 0
        %533 = vmatprep.subr.bf16.mxu0 0
        %534 = vmatpush1.bf16.msra.mxu0 0
        %535 = vmatprep.subr.bf16.mxu0 0
        %536 = vmatpush1.bf16.msra.mxu0 0
        %537 = vmatprep.subr.bf16.mxu0 0
        %538 = vmatpush1.bf16.msra.mxu0 0
        %539 = vmatprep.subr.bf16.mxu0 0
        %540 = vmatpush1.bf16.msra.mxu0 0
        %541 = vmatprep.subr.bf16.mxu0 0
        %542 = vmatpush1.bf16.msra.mxu0 0
        %543 = vmatprep.subr.bf16.mxu0 0
        %544 = vmatpush1.bf16.msra.mxu0 0
        %545 = vmatprep.mubr.bf16.mxu0 0
        %546 = vmatmul.mubr.bf16.gmra.mrb[0].mxu0 %v461
        %v547 = vpop.f32.mrb[0].mxu0
        %v548 = vadd.f32 0.0, %v547
        %v549 = vpop.f32.mrb[0].mxu0
        %v550 = vpop.f32.mrb[0].mxu0
        %v551 = vpop.f32.mrb[0].mxu0
        %552 = vdwg.mxu0
        %v553 = vld [vmem:[%s2] sm:$0xf]
        %555 = vset.pattern.permute.xlu0 0
        %556 = vperm.xlu0 %555, %v553
        %v557 = vpop.permute.xlu0 %556
        %v559 = vmul.f32 %v507, %v557
        %v560 = vmul.f32 %v509, %v557
        %v561 = vmul.f32 %v548, %v557
        %v562 = vld [vmem:[%s3] sm:$0xf]
        %564 = vset.pattern.permute.xlu0 0
        %565 = vperm.xlu0 %564, %v562
        %v566 = vpop.permute.xlu0 %565
        %v568 = vadd.f32 %v559, %v566
        %v569 = vadd.f32 %v560, %v566
        %v570 = vadd.f32 %v561, %v566
        %vm571 = vcmp.gt.f32.partialorder %v568, 0.0
        %vm572 = vcmp.gt.f32.partialorder %v569, 0.0
        %vm573 = vcmp.gt.f32.partialorder %v570, 0.0
        %v574 = vmul.f32 %v568, 0.1
        %v575 = vmul.f32 %v569, 0.1
        %v576 = vmul.f32 %v570, 0.1
        %v577 = vsel %vm571, %v568, %v574
        %v578 = vsel %vm572, %v569, %v575
        %v579 = vsel %vm573, %v570, %v576
        %v580 = vld [vmem:[%s7] sm:$0x7]
        %v582 = vlaneseq
        %v583 = vshrl.u32 %v582, 7
        %v584 = vsub.s32 0, %v583
        %v585 = vrot.slane %v580, %v584
        %v586 = vlaneseq
        %v587 = vshrl.u32 %v586, 7
        %v588 = vsub.s32 1, %v587
        %v589 = vrot.slane %v580, %v588
        %v590 = vlaneseq
        %v591 = vshrl.u32 %v590, 7
        %v592 = vsub.s32 2, %v591
        %v593 = vrot.slane %v580, %v592
        %v597 = vmul.f32 %v577, %v585
        %v598 = vmul.f32 %v578, %v589
        %v599 = vmul.f32 %v579, %v593
        %v600 = vpack.c.bf16 %v597, %v597
        %v601 = vpack.c.bf16 %v598, %v598
        %v602 = vpack.c.bf16 %v599, %v599
        %606 = vrot.lane.b32.xlu0 %v600, 19
        %v607 = vpop.permute.xlu0 %606
        %608 = vrot.lane.b32.xlu0 %v601, 19
        %v609 = vpop.permute.xlu0 %608
        %610 = vrot.lane.b32.xlu0 %v602, 19
        %v611 = vpop.permute.xlu0 %610
        %vm612 = vcmask 154624
        %v613 = vsel %vm612, %v607, %v609
        %v614 = vsel %vm612, %v609, %v611
        %vm615 = vcmask 154624
        %v618 = vsel %vm615, 0, %v607
        %vm619 = vcmask 400384
        %v621 = vsel %vm619, %v614, 0
        %v624 = vrot.slane %v618, 6
        %v625 = vrot.slane %v613, 6
        %v626 = vrot.slane %v621, 6
        %627 = vrot.lane.b32.xlu0 %v624, 127
        %v628 = vpop.permute.xlu0 %627
        %629 = vrot.lane.b32.xlu0 %v625, 127
        %v630 = vpop.permute.xlu0 %629
        %631 = vrot.lane.b32.xlu0 %v626, 127
        %v632 = vpop.permute.xlu0 %631
        %v633 = vsel %vm338, %v628, %v630
        %v634 = vsel %vm338, %v630, %v632
        %v635 = vrot.slane %v618, 4
        %v636 = vrot.slane %v613, 4
        %v637 = vrot.slane %v621, 4
        %638 = vrot.lane.b32.xlu0 %v635, 126
        %v639 = vpop.permute.xlu0 %638
        %640 = vrot.lane.b32.xlu0 %v636, 126
        %v641 = vpop.permute.xlu0 %640
        %642 = vrot.lane.b32.xlu0 %v637, 126
        %v643 = vpop.permute.xlu0 %642
        %v644 = vsel %vm349, %v639, %v641
        %v645 = vsel %vm349, %v641, %v643
        %v646 = vrot.slane %v618, 2
        %v647 = vrot.slane %v613, 2
        %v648 = vrot.slane %v621, 2
        %649 = vrot.lane.b32.xlu0 %v646, 110
        %v650 = vpop.permute.xlu0 %649
        %651 = vrot.lane.b32.xlu0 %v647, 110
        %v652 = vpop.permute.xlu0 %651
        %653 = vrot.lane.b32.xlu0 %v648, 110
        %v654 = vpop.permute.xlu0 %653
        %v655 = vsel %vm359, %v650, %v652
        %v656 = vsel %vm359, %v652, %v654
        %657 = vrot.lane.b32.xlu0 %v618, 109
        %v658 = vpop.permute.xlu0 %657
        %659 = vrot.lane.b32.xlu0 %v613, 109
        %v660 = vpop.permute.xlu0 %659
        %661 = vrot.lane.b32.xlu0 %v621, 109
        %v662 = vpop.permute.xlu0 %661
        %v663 = vsel %vm368, %v658, %v660
        %v664 = vsel %vm368, %v660, %v662
        %665 = vrot.lane.b32.xlu0 %v624, 108
        %v666 = vpop.permute.xlu0 %665
        %667 = vrot.lane.b32.xlu0 %v625, 108
        %v668 = vpop.permute.xlu0 %667
        %669 = vrot.lane.b32.xlu0 %v626, 108
        %v670 = vpop.permute.xlu0 %669
        %v671 = vsel %vm377, %v666, %v668
        %v672 = vsel %vm377, %v668, %v670
        %673 = vrot.lane.b32.xlu0 %v635, 92
        %v674 = vpop.permute.xlu0 %673
        %675 = vrot.lane.b32.xlu0 %v636, 92
        %v676 = vpop.permute.xlu0 %675
        %677 = vrot.lane.b32.xlu0 %v637, 92
        %v678 = vpop.permute.xlu0 %677
        %v679 = vsel %vm386, %v674, %v676
        %v680 = vsel %vm386, %v676, %v678
        %681 = vrot.lane.b32.xlu0 %v646, 91
        %v682 = vpop.permute.xlu0 %681
        %683 = vrot.lane.b32.xlu0 %v647, 91
        %v684 = vpop.permute.xlu0 %683
        %685 = vrot.lane.b32.xlu0 %v648, 91
        %v686 = vpop.permute.xlu0 %685
        %v687 = vsel %vm395, %v682, %v684
        %v688 = vsel %vm395, %v684, %v686
        %689 = vrot.lane.b32.xlu0 %v618, 90
        %v690 = vpop.permute.xlu0 %689
        %691 = vrot.lane.b32.xlu0 %v613, 90
        %v692 = vpop.permute.xlu0 %691
        %693 = vrot.lane.b32.xlu0 %v621, 90
        %v694 = vpop.permute.xlu0 %693
        %v695 = vsel %vm404, %v690, %v692
        %v696 = vsel %vm404, %v692, %v694
        %v698 = vsel %vm407, %v618, %v633
        %v701 = vsel %vm407, %v613, %v634
        %v703 = vsel %vm407, %v621, %v632
        %v705 = vsel %vm417, %v698, %v644
        %v707 = vsel %vm417, %v701, %v645
        %v709 = vsel %vm417, %v703, %v643
        %v711 = vsel %vm424, %v705, %v655
        %v714 = vsel %vm424, %v707, %v656
        %v717 = vsel %vm424, %v709, %v654
        %v721 = vsel %vm407, %v663, %v671
        %v724 = vsel %vm407, %v664, %v672
        %v727 = vsel %vm407, %v662, %v670
        %v729 = vsel %vm417, %v721, %v679
        %v731 = vsel %vm417, %v724, %v680
        %v733 = vsel %vm417, %v727, %v678
        %v735 = vsel %vm424, %v729, %v687
        %v738 = vsel %vm424, %v731, %v688
        %v741 = vsel %vm424, %v733, %v686
        %v743 = vld [vmem:[%s4] sm:$0x3]
        %v745 = vsel %vm459, %v743, 0
        %v748 = vsel %vm407, %v695, 0
        %v751 = vsel %vm407, %v696, 0
        %v754 = vsel %vm407, %v694, 0
        %756 = vmatprep.subr.bf16.mxu0 %v714
        %757 = vmatpush1.bf16.msra.mxu0 %v711
        %758 = vmatprep.subr.bf16.mxu0 %v738
        %759 = vmatpush1.bf16.msra.mxu0 %v735
        %760 = vmatprep.subr.bf16.mxu0 %v751
        %761 = vmatpush1.bf16.msra.mxu0 %v748
        %762 = vmatprep.subr.bf16.mxu0 0
        %763 = vmatpush1.bf16.msra.mxu0 0
        %764 = vmatprep.subr.bf16.mxu0 0
        %765 = vmatpush1.bf16.msra.mxu0 0
        %766 = vmatprep.subr.bf16.mxu0 0
        %767 = vmatpush1.bf16.msra.mxu0 0
        %768 = vmatprep.subr.bf16.mxu0 0
        %769 = vmatpush1.bf16.msra.mxu0 0
        %770 = vmatprep.subr.bf16.mxu0 0
        %771 = vmatpush1.bf16.msra.mxu0 0
        %772 = vmatprep.subr.bf16.mxu0 0
        %773 = vmatpush1.bf16.msra.mxu0 0
        %774 = vmatprep.subr.bf16.mxu0 0
        %775 = vmatpush1.bf16.msra.mxu0 0
        %776 = vmatprep.subr.bf16.mxu0 0
        %777 = vmatpush1.bf16.msra.mxu0 0
        %778 = vmatprep.subr.bf16.mxu0 0
        %779 = vmatpush1.bf16.msra.mxu0 0
        %780 = vmatprep.subr.bf16.mxu0 0
        %781 = vmatpush1.bf16.msra.mxu0 0
        %782 = vmatprep.subr.bf16.mxu0 0
        %783 = vmatpush1.bf16.msra.mxu0 0
        %784 = vmatprep.subr.bf16.mxu0 0
        %785 = vmatpush1.bf16.msra.mxu0 0
        %786 = vmatprep.subr.bf16.mxu0 0
        %787 = vmatpush1.bf16.msra.mxu0 0
        %788 = vmatprep.mubr.bf16.mxu0 0
        %789 = vmatmul.mubr.bf16.gmra.mrb[0].mxu0 %v745
        %v790 = vpop.f32.mrb[0].mxu0
        %v791 = vadd.f32 0.0, %v790
        %v792 = vpop.f32.mrb[0].mxu0
        %v793 = vadd.f32 0.0, %v792
        %v794 = vpop.f32.mrb[0].mxu0
        %v795 = vpop.f32.mrb[0].mxu0
        %796 = vdwg.mxu0
        %797 = vmatprep.subr.bf16.mxu0 0
        %798 = vmatpush1.bf16.msra.mxu0 %v717
        %799 = vmatprep.subr.bf16.mxu0 0
        %800 = vmatpush1.bf16.msra.mxu0 %v741
        %801 = vmatprep.subr.bf16.mxu0 0
        %802 = vmatpush1.bf16.msra.mxu0 %v754
        %803 = vmatprep.subr.bf16.mxu0 0
        %804 = vmatpush1.bf16.msra.mxu0 0
        %805 = vmatprep.subr.bf16.mxu0 0
        %806 = vmatpush1.bf16.msra.mxu0 0
        %807 = vmatprep.subr.bf16.mxu0 0
        %808 = vmatpush1.bf16.msra.mxu0 0
        %809 = vmatprep.subr.bf16.mxu0 0
        %810 = vmatpush1.bf16.msra.mxu0 0
        %811 = vmatprep.subr.bf16.mxu0 0
        %812 = vmatpush1.bf16.msra.mxu0 0
        %813 = vmatprep.subr.bf16.mxu0 0
        %814 = vmatpush1.bf16.msra.mxu0 0
        %815 = vmatprep.subr.bf16.mxu0 0
        %816 = vmatpush1.bf16.msra.mxu0 0
        %817 = vmatprep.subr.bf16.mxu0 0
        %818 = vmatpush1.bf16.msra.mxu0 0
        %819 = vmatprep.subr.bf16.mxu0 0
        %820 = vmatpush1.bf16.msra.mxu0 0
        %821 = vmatprep.subr.bf16.mxu0 0
        %822 = vmatpush1.bf16.msra.mxu0 0
        %823 = vmatprep.subr.bf16.mxu0 0
        %824 = vmatpush1.bf16.msra.mxu0 0
        %825 = vmatprep.subr.bf16.mxu0 0
        %826 = vmatpush1.bf16.msra.mxu0 0
        %827 = vmatprep.subr.bf16.mxu0 0
        %828 = vmatpush1.bf16.msra.mxu0 0
        %829 = vmatprep.mubr.bf16.mxu0 0
        %830 = vmatmul.mubr.bf16.gmra.mrb[0].mxu0 %v745
        %v831 = vpop.f32.mrb[0].mxu0
        %v832 = vadd.f32 0.0, %v831
        %v833 = vpop.f32.mrb[0].mxu0
        %v834 = vpop.f32.mrb[0].mxu0
        %v835 = vpop.f32.mrb[0].mxu0
        %836 = vdwg.mxu0
        %v837 = vld [vmem:[%s5] sm:$0xf]
        %839 = vset.pattern.permute.xlu0 0
        %840 = vperm.xlu0 %839, %v837
        %v841 = vpop.permute.xlu0 %840
        %v843 = vmul.f32 %v791, %v841
        %v844 = vmul.f32 %v793, %v841
        %v845 = vmul.f32 %v832, %v841
        %v846 = vld [vmem:[%s6] sm:$0xf]
        %848 = vset.pattern.permute.xlu0 0
        %849 = vperm.xlu0 %848, %v846
        %v850 = vpop.permute.xlu0 %849
        %v852 = vadd.f32 %v843, %v850
        %v853 = vadd.f32 %v844, %v850
        %v854 = vadd.f32 %v845, %v850
        %v855 = vunpack.c.l.bf16 %v305
        %v856 = vunpack.c.h.bf16 %v305
        %v859 = vcombine.high %v855, %v855
        %860 = vrot.lane.b32.xlu0 %v855, 109
        %v861 = vpop.permute.xlu0 %860
        %862 = vrot.lane.b32.xlu0 %v859, 109
        %v863 = vpop.permute.xlu0 %862
        %864 = vrot.lane.b32.xlu0 %v856, 109
        %v865 = vpop.permute.xlu0 %864
        %vm866 = vcmask 891904
        %v867 = vsel %vm866, %v861, %v863
        %v868 = vsel %vm866, %v863, %v865
        %v872 = vadd.f32 %v852, %v867
        %v873 = vadd.f32 %v853, %v868
        %v874 = vadd.f32 %v854, %v865
        %vm875 = vcmp.gt.f32.partialorder %v872, 0.0
        %vm876 = vcmp.gt.f32.partialorder %v873, 0.0
        %vm877 = vcmp.gt.f32.partialorder %v874, 0.0
        %v878 = vmul.f32 %v872, 0.1
        %v879 = vmul.f32 %v873, 0.1
        %v880 = vmul.f32 %v874, 0.1
        %v881 = vsel %vm875, %v872, %v878
        %v882 = vsel %vm876, %v873, %v879
        %v883 = vsel %vm877, %v874, %v880
        %v884 = vpack.c.bf16 %v881, %v881
        %v885 = vpack.c.bf16 %v882, %v882
        %v886 = vpack.c.bf16 %v883, %v883
        %v890 = vcombine.low %v884, %v885
        %v892 = vunpack.c.l.s4 1983009808
        %v893 = vunpack.c.0.s8 %v892
        %v894 = vlaneseq
        %v895 = vshrl.u32 %v894, 7
        %v896 = vsub.s32 %v893, %v895
        %v897 = vrot.slane %v890, %v896
        %v899 = vunpack.c.l.s4 1983009808
        %v900 = vunpack.c.0.s8 %v899
        %v901 = vlaneseq
        %v902 = vshrl.u32 %v901, 7
        %v903 = vsub.s32 %v900, %v902
        %v904 = vrot.slane %v886, %v903
        %v905 = vcombine.low %v897, %v904
        %vm907 = vcmask 1043458
        %vm908 = vmor %vm907, %vm407
        %vm909 = vcmask 242692
        %vm910 = vmor %vm909, %vm908
        %911 = vst.msk [vmem:[%s298] sm:$0x3f] %vm910, %v905
        %s912 = sand.u32 %s203, 1
        %s913 = scalar_lea.sflag [#allocation3], %s912
        %s914 = sand.u32 %s203, 1
        %s915 = smul.addr %s914, 6
        %s916 = scalar_lea.vmem [#allocation2], %s915
        // Predicated region
        $region53: #{tpu_custom_call.1} parent=51 // pred_check
          %p917 = pneg %p213
        $region54: #{tpu_custom_call.1} parent=51 // pred_check_branch
          %919 = sbr.rel (%p917) target = $region56
        $region55: #{tpu_custom_call.1} parent=51 // pred_region
          %s921 = ssub.s32 96, 96
          %922 = vsyncadd %s913, %s921
          %s923 = smul.addr %s22, 3
          %s924 = smul.addr %s923, 32
          %s925 = scalar_lea.hbm %s8, %s924
          %s927 = sshll.u32 %s916, 4
          %s928 = int_to_ptr.vmem [resolvable:$true] %s927
          %930 = dma.vmem_to_hbm [thread:$0]  %s928, 96, %s925, %s913
        $region56: #{tpu_custom_call.1} parent=51 // pred_fallthru
          _
      $region52: #{tpu_custom_call.1} parent=5 // pred_fallthru
        _
      %p931 = scmp.le.s32.totalorder 2, %s17
      // Predicated region
      $region57: #{tpu_custom_call.1} parent=5 // pred_check
        %p932 = pneg %p931
      $region58: #{tpu_custom_call.1} parent=5 // pred_check_branch
        %934 = sbr.rel (%p932) target = $region60
      $region59: #{tpu_custom_call.1} parent=5 // pred_region
        %s935 = ssub.s32 %s17, 2
        // Predicated region
        $region61: #{tpu_custom_call.1} parent=59 // pred_check
          %p936 = pneg %p219
        $region62: #{tpu_custom_call.1} parent=59 // pred_check_branch
          %938 = sbr.rel (%p936) target = $region64
        $region63: #{tpu_custom_call.1} parent=59 // pred_region
          %s939 = sand.u32 %s204, 1
          %s940 = scalar_lea.sflag [#allocation3], %s939
          %s941 = sand.u32 %s204, 1
          %s942 = smul.addr %s941, 6
          %s943 = scalar_lea.vmem [#allocation2], %s942
          %944 = dma.done %s940, 96
        $region64: #{tpu_custom_call.1} parent=59 // pred_fallthru
          _
      $region60: #{tpu_custom_call.1} parent=5 // pred_fallthru
        _
    $region6: #{tpu_custom_call.1} parent=1 // loop_footer
      %s21 = sadd.s32 1, %s17
    $region7: #{tpu_custom_call.1} parent=1 // loop_footer_branch
      %16 = sbr.rel target = $region3
    $region8: #{tpu_custom_call.1} parent=1 // loop_exit
      _
    %945 = vsyncpa [#allocation3], 1
    %s946 = scalar_lea.sflag [#allocation3], 1
    %947 = vsyncpa %s946, 1

</llo_original>
